<compile_context>
chip_gen: v5e
topology: v5e:2x2
jax: 0.10.0
libtpu: 0.0.40
codegen_flags: <defaults>
</compile_context>

<pallas_src>
import jax
import jax.numpy as jnp
from jax.experimental import pallas as pl
from jax.experimental.pallas import tpu as pltpu


def _softq_kernel(xt_ref,
                  w1_ref, b1_ref,
                  w2_ref, b2_ref,
                  w3_ref, b3_ref,
                  w4_ref, b4_ref,
                  w5_ref, b5_ref,
                  out_ref):
    # Feature-major: activations are (features, tile_B); batch rides the lane axis.
    h = jnp.maximum(
        jnp.dot(w1_ref[...], xt_ref[...], preferred_element_type=jnp.float32)
        + b1_ref[...], 0.0)                                        # (256, tile)
    h = jnp.maximum(
        jnp.dot(w2_ref[...], h, preferred_element_type=jnp.float32)
        + b2_ref[...], 0.0)                                        # (128, tile)
    h = jnp.maximum(
        jnp.dot(w3_ref[...], h, preferred_element_type=jnp.float32)
        + b3_ref[...], 0.0)                                        # (64, tile)
    h = jnp.maximum(
        jnp.dot(w4_ref[...], h, preferred_element_type=jnp.float32)
        + b4_ref[...], 0.0)                                        # (16, tile)
    # fc5 (no activation): lane-dense (1, tile) full-width store.
    out_ref[...] = (
        jnp.dot(w5_ref[...], h, preferred_element_type=jnp.float32)
        + b5_ref[...])                                             # (1, tile)


def _round_up(n, m):
    return ((n + m - 1) // m) * m


def _num_tensorcores():
    """2 TensorCores per chip on v7x, 1 on v5e/v6e.  Best-effort detection."""
    try:
        kind = jax.devices()[0].device_kind.lower()
        if "v7" in kind or "7x" in kind:
            return 2
    except Exception:
        pass
    return 1


def _choose_batch_tile(batch, num_tc, max_tile=4096):
    """Single grid step on 1-TC chips; even per-core split on 2-TC chips.

    Tile is a multiple of 128 so the batch (lane) axis stays fully dense.
    """
    per_core = pl.cdiv(batch, num_tc)
    return min(_round_up(per_core, 128), max_tile)


def soft_q_forward(x, a, params, *, max_batch_tile=4096):
    """SoftQNetwork.forward via a single fused, feature-major Pallas kernel.

    x: [B, obs_dim] f32, a: [B, act_dim] f32.
    params: dict of weights stored [out, in] (PyTorch layout) and biases [out, 1].
    Returns q: [B, 1] f32.
    """
    B, obs_dim = x.shape
    act_dim = a.shape[1]
    in_dim = obs_dim + act_dim

    num_tc = _num_tensorcores()
    tile = _choose_batch_tile(B, num_tc, max_batch_tile)
    Bp = _round_up(B, tile)
    grid = (Bp // tile,)

    # Fold concat + pad into one wrapper-side copy, then go feature-major
    # (batch on the lane axis).
    h0 = jnp.concatenate([x, a], axis=1)            # (B, in_dim)
    if Bp != B:
        h0 = jnp.pad(h0, ((0, Bp - B), (0, 0)))
    xt = h0.T                                        # (in_dim, Bp)

    param_arrays = [
        params["w1"], params["b1"],
        params["w2"], params["b2"],
        params["w3"], params["b3"],
        params["w4"], params["b4"],
        params["w5"], params["b5"],
    ]

    # Input / output tiled along the batch (lane) axis; weights whole in VMEM.
    xt_spec = pl.BlockSpec((in_dim, tile), lambda i: (0, i))
    param_specs = [pl.BlockSpec(memory_space=pltpu.MemorySpace.VMEM)
                   for _ in param_arrays]
    out_spec = pl.BlockSpec((1, tile), lambda i: (0, i))

    flops = 2 * Bp * (in_dim * 256 + 256 * 128 + 128 * 64 + 64 * 16 + 16 * 1)
    param_bytes = sum(int(p.size) for p in param_arrays) * 4
    bytes_accessed = (in_dim * Bp + Bp) * 4 + param_bytes
    cost = pl.CostEstimate(flops=flops, transcendentals=0,
                           bytes_accessed=bytes_accessed)

    q = pl.pallas_call(
        _softq_kernel,
        out_shape=jax.ShapeDtypeStruct((1, Bp), jnp.float32),
        grid_spec=pltpu.PrefetchScalarGridSpec(
            num_scalar_prefetch=0,
            grid=grid,
            in_specs=[xt_spec] + param_specs,
            out_specs=out_spec,
        ),
        compiler_params=pltpu.CompilerParams(
            dimension_semantics=("parallel",)),
        cost_estimate=cost,
    )(xt, *param_arrays)

    # Back to the PyTorch (B, 1) layout; drop padded rows.
    return q[0, :B].reshape(B, 1)


def init_params(key, obs_dim, act_dim):
    """PyTorch nn.Linear default init: U(-1/sqrt(fan_in), 1/sqrt(fan_in)).

    Weights stored [out, in] (PyTorch layout); biases stored [out, 1].
    """
    dims = {
        "1": (obs_dim + act_dim, 256),
        "2": (256, 128),
        "3": (128, 64),
        "4": (64, 16),
        "5": (16, 1),
    }
    params = {}
    for name, (fan_in, fan_out) in dims.items():
        key, kw, kb = jax.random.split(key, 3)
        bound = 1.0 / jnp.sqrt(float(fan_in))
        params["w" + name] = jax.random.uniform(
            kw, (fan_out, fan_in), jnp.float32, -bound, bound)
        params["b" + name] = jax.random.uniform(
            kb, (fan_out, 1), jnp.float32, -bound, bound)
    return params


def soft_q_reference(x, a, p):
    """Pure-JAX reference of SoftQNetwork.forward (for correctness check)."""
    h = jnp.concatenate([x, a], axis=1)
    h = jax.nn.relu(h @ p["w1"].T + p["b1"].T)
    h = jax.nn.relu(h @ p["w2"].T + p["b2"].T)
    h = jax.nn.relu(h @ p["w3"].T + p["b3"].T)
    h = jax.nn.relu(h @ p["w4"].T + p["b4"].T)
    return h @ p["w5"].T + p["b5"].T


if __name__ == "__main__":
    # Small synthetic env: obs_dim=17, act_dim=6 (fc1 input = 23), batch=64.
    OBS_DIM = 17
    ACT_DIM = 6
    BATCH = 64

    key = jax.random.PRNGKey(0)
    key, kx, ka, kp = jax.random.split(key, 4)
    params = init_params(kp, OBS_DIM, ACT_DIM)
    x = jax.random.normal(kx, (BATCH, OBS_DIM), jnp.float32)
    a = jax.random.normal(ka, (BATCH, ACT_DIM), jnp.float32)

    q = soft_q_forward(x, a, params)
    jax.block_until_ready(q)

    q_ref = soft_q_reference(x, a, params)
    assert q.shape == (BATCH, 1)
    assert jnp.allclose(q, q_ref, atol=1e-4, rtol=1e-4), float(
        jnp.max(jnp.abs(q - q_ref)))

    print("KERNEL_OK")
</pallas_src>

<mosaic_0001>
module attributes {stable_mosaic.version = 11 : i64} {
  func.func @_softq_kernel(%arg0: i32, %arg1: memref<23x128xf32, #tpu.memory_space<vmem>>, %arg2: memref<256x23xf32, #tpu.memory_space<vmem>>, %arg3: memref<256x1xf32, #tpu.memory_space<vmem>>, %arg4: memref<128x256xf32, #tpu.memory_space<vmem>>, %arg5: memref<128x1xf32, #tpu.memory_space<vmem>>, %arg6: memref<64x128xf32, #tpu.memory_space<vmem>>, %arg7: memref<64x1xf32, #tpu.memory_space<vmem>>, %arg8: memref<16x64xf32, #tpu.memory_space<vmem>>, %arg9: memref<16x1xf32, #tpu.memory_space<vmem>>, %arg10: memref<1x16xf32, #tpu.memory_space<vmem>>, %arg11: memref<1x1xf32, #tpu.memory_space<vmem>>, %arg12: memref<1x128xf32, #tpu.memory_space<vmem>>) attributes {dimension_semantics = [#tpu.dimension_semantics<parallel>], iteration_bounds = array<i64: 1>, scalar_prefetch = 0 : i64, scratch_operands = 0 : i64, tpu.core_type = #tpu.core_type<tc>, window_params = [{transform_indices = @transform_0, window_bounds = array<i64: 23, 128>}, {pipeline_mode = #tpu.pipeline_mode<synchronous>, transform_indices = @transform_1, window_bounds = array<i64: 256, 23>}, {pipeline_mode = #tpu.pipeline_mode<synchronous>, transform_indices = @transform_2, window_bounds = array<i64: 256, 1>}, {pipeline_mode = #tpu.pipeline_mode<synchronous>, transform_indices = @transform_3, window_bounds = array<i64: 128, 256>}, {pipeline_mode = #tpu.pipeline_mode<synchronous>, transform_indices = @transform_4, window_bounds = array<i64: 128, 1>}, {pipeline_mode = #tpu.pipeline_mode<synchronous>, transform_indices = @transform_5, window_bounds = array<i64: 64, 128>}, {pipeline_mode = #tpu.pipeline_mode<synchronous>, transform_indices = @transform_6, window_bounds = array<i64: 64, 1>}, {pipeline_mode = #tpu.pipeline_mode<synchronous>, transform_indices = @transform_7, window_bounds = array<i64: 16, 64>}, {pipeline_mode = #tpu.pipeline_mode<synchronous>, transform_indices = @transform_8, window_bounds = array<i64: 16, 1>}, {pipeline_mode = #tpu.pipeline_mode<synchronous>, transform_indices = @transform_9, window_bounds = array<i64: 1, 16>}, {pipeline_mode = #tpu.pipeline_mode<synchronous>, transform_indices = @transform_10, window_bounds = array<i64: 1, 1>}, {transform_indices = @transform_11, window_bounds = array<i64: 1, 128>}]} {
    %c0 = arith.constant 0 : index
    %c0_0 = arith.constant 0 : index
    %0 = vector.load %arg2[%c0, %c0_0] : memref<256x23xf32, #tpu.memory_space<vmem>>, vector<256x23xf32>
    %c0_1 = arith.constant 0 : index
    %c0_2 = arith.constant 0 : index
    %1 = vector.load %arg1[%c0_1, %c0_2] : memref<23x128xf32, #tpu.memory_space<vmem>>, vector<23x128xf32>
    %cst = arith.constant dense<0.000000e+00> : vector<256x128xf32>
    %2 = tpu.matmul %0, %1, %cst {dimension_numbers = #tpu.dot_dimension_numbers<[1], [0], [0], [1], [0, 0, 1, 1], [], []>} : vector<256x23xf32>, vector<23x128xf32>, vector<256x128xf32> -> vector<256x128xf32>
    %c0_3 = arith.constant 0 : index
    %c0_4 = arith.constant 0 : index
    %3 = vector.load %arg3[%c0_3, %c0_4] : memref<256x1xf32, #tpu.memory_space<vmem>>, vector<256x1xf32>
    %4 = vector.broadcast %3 : vector<256x1xf32> to vector<256x128xf32>
    %5 = arith.addf %2, %4 : vector<256x128xf32>
    %cst_5 = arith.constant 0.000000e+00 : f32
    %6 = vector.broadcast %cst_5 : f32 to vector<256x128xf32>
    %7 = arith.maximumf %5, %6 : vector<256x128xf32>
    %c0_6 = arith.constant 0 : index
    %c0_7 = arith.constant 0 : index
    %8 = vector.load %arg4[%c0_6, %c0_7] : memref<128x256xf32, #tpu.memory_space<vmem>>, vector<128x256xf32>
    %cst_8 = arith.constant dense<0.000000e+00> : vector<128x128xf32>
    %9 = tpu.matmul %8, %7, %cst_8 {dimension_numbers = #tpu.dot_dimension_numbers<[1], [0], [0], [1], [0, 0, 1, 1], [], []>} : vector<128x256xf32>, vector<256x128xf32>, vector<128x128xf32> -> vector<128x128xf32>
    %c0_9 = arith.constant 0 : index
    %c0_10 = arith.constant 0 : index
    %10 = vector.load %arg5[%c0_9, %c0_10] : memref<128x1xf32, #tpu.memory_space<vmem>>, vector<128x1xf32>
    %11 = vector.broadcast %10 : vector<128x1xf32> to vector<128x128xf32>
    %12 = arith.addf %9, %11 : vector<128x128xf32>
    %cst_11 = arith.constant 0.000000e+00 : f32
    %13 = vector.broadcast %cst_11 : f32 to vector<128x128xf32>
    %14 = arith.maximumf %12, %13 : vector<128x128xf32>
    %c0_12 = arith.constant 0 : index
    %c0_13 = arith.constant 0 : index
    %15 = vector.load %arg6[%c0_12, %c0_13] : memref<64x128xf32, #tpu.memory_space<vmem>>, vector<64x128xf32>
    %cst_14 = arith.constant dense<0.000000e+00> : vector<64x128xf32>
    %16 = tpu.matmul %15, %14, %cst_14 {dimension_numbers = #tpu.dot_dimension_numbers<[1], [0], [0], [1], [0, 0, 1, 1], [], []>} : vector<64x128xf32>, vector<128x128xf32>, vector<64x128xf32> -> vector<64x128xf32>
    %c0_15 = arith.constant 0 : index
    %c0_16 = arith.constant 0 : index
    %17 = vector.load %arg7[%c0_15, %c0_16] : memref<64x1xf32, #tpu.memory_space<vmem>>, vector<64x1xf32>
    %18 = vector.broadcast %17 : vector<64x1xf32> to vector<64x128xf32>
    %19 = arith.addf %16, %18 : vector<64x128xf32>
    %cst_17 = arith.constant 0.000000e+00 : f32
    %20 = vector.broadcast %cst_17 : f32 to vector<64x128xf32>
    %21 = arith.maximumf %19, %20 : vector<64x128xf32>
    %c0_18 = arith.constant 0 : index
    %c0_19 = arith.constant 0 : index
    %22 = vector.load %arg8[%c0_18, %c0_19] : memref<16x64xf32, #tpu.memory_space<vmem>>, vector<16x64xf32>
    %cst_20 = arith.constant dense<0.000000e+00> : vector<16x128xf32>
    %23 = tpu.matmul %22, %21, %cst_20 {dimension_numbers = #tpu.dot_dimension_numbers<[1], [0], [0], [1], [0, 0, 1, 1], [], []>} : vector<16x64xf32>, vector<64x128xf32>, vector<16x128xf32> -> vector<16x128xf32>
    %c0_21 = arith.constant 0 : index
    %c0_22 = arith.constant 0 : index
    %24 = vector.load %arg9[%c0_21, %c0_22] : memref<16x1xf32, #tpu.memory_space<vmem>>, vector<16x1xf32>
    %25 = vector.broadcast %24 : vector<16x1xf32> to vector<16x128xf32>
    %26 = arith.addf %23, %25 : vector<16x128xf32>
    %cst_23 = arith.constant 0.000000e+00 : f32
    %27 = vector.broadcast %cst_23 : f32 to vector<16x128xf32>
    %28 = arith.maximumf %26, %27 : vector<16x128xf32>
    %c0_24 = arith.constant 0 : index
    %c0_25 = arith.constant 0 : index
    %29 = vector.load %arg10[%c0_24, %c0_25] : memref<1x16xf32, #tpu.memory_space<vmem>>, vector<1x16xf32>
    %cst_26 = arith.constant dense<0.000000e+00> : vector<1x128xf32>
    %30 = tpu.matmul %29, %28, %cst_26 {dimension_numbers = #tpu.dot_dimension_numbers<[1], [0], [0], [1], [0, 0, 1, 1], [], []>} : vector<1x16xf32>, vector<16x128xf32>, vector<1x128xf32> -> vector<1x128xf32>
    %c0_27 = arith.constant 0 : index
    %c0_28 = arith.constant 0 : index
    %31 = vector.load %arg11[%c0_27, %c0_28] : memref<1x1xf32, #tpu.memory_space<vmem>>, vector<1x1xf32>
    %32 = vector.broadcast %31 : vector<1x1xf32> to vector<1x128xf32>
    %33 = arith.addf %30, %32 : vector<1x128xf32>
    %c0_29 = arith.constant 0 : index
    %c0_30 = arith.constant 0 : index
    %34 = vector.load %arg12[%c0_29, %c0_30] : memref<1x128xf32, #tpu.memory_space<vmem>>, vector<1x128xf32>
    tpu.vector_store %arg12[%c0_29, %c0_30], %33 {strides = array<i32>} : memref<1x128xf32, #tpu.memory_space<vmem>>, vector<1x128xf32>,
    return
  }
  func.func @transform_0(%arg0: i32) -> (i32, i32) {
    %c0_i32 = arith.constant 0 : i32
    %c0_i32_0 = arith.constant 0 : i32
    return %c0_i32, %arg0 : i32, i32
  }
  func.func @transform_1(%arg0: i32) -> (i32, i32) {
    %c0_i32 = arith.constant 0 : i32
    %c0_i32_0 = arith.constant 0 : i32
    %c0_i32_1 = arith.constant 0 : i32
    return %c0_i32, %c0_i32_0 : i32, i32
  }
  func.func @transform_2(%arg0: i32) -> (i32, i32) {
    %c0_i32 = arith.constant 0 : i32
    %c0_i32_0 = arith.constant 0 : i32
    %c0_i32_1 = arith.constant 0 : i32
    return %c0_i32, %c0_i32_0 : i32, i32
  }
  func.func @transform_3(%arg0: i32) -> (i32, i32) {
    %c0_i32 = arith.constant 0 : i32
    %c0_i32_0 = arith.constant 0 : i32
    %c0_i32_1 = arith.constant 0 : i32
    return %c0_i32, %c0_i32_0 : i32, i32
  }
  func.func @transform_4(%arg0: i32) -> (i32, i32) {
    %c0_i32 = arith.constant 0 : i32
    %c0_i32_0 = arith.constant 0 : i32
    %c0_i32_1 = arith.constant 0 : i32
    return %c0_i32, %c0_i32_0 : i32, i32
  }
  func.func @transform_5(%arg0: i32) -> (i32, i32) {
    %c0_i32 = arith.constant 0 : i32
    %c0_i32_0 = arith.constant 0 : i32
    %c0_i32_1 = arith.constant 0 : i32
    return %c0_i32, %c0_i32_0 : i32, i32
  }
  func.func @transform_6(%arg0: i32) -> (i32, i32) {
    %c0_i32 = arith.constant 0 : i32
    %c0_i32_0 = arith.constant 0 : i32
    %c0_i32_1 = arith.constant 0 : i32
    return %c0_i32, %c0_i32_0 : i32, i32
  }
  func.func @transform_7(%arg0: i32) -> (i32, i32) {
    %c0_i32 = arith.constant 0 : i32
    %c0_i32_0 = arith.constant 0 : i32
    %c0_i32_1 = arith.constant 0 : i32
    return %c0_i32, %c0_i32_0 : i32, i32
  }
  func.func @transform_8(%arg0: i32) -> (i32, i32) {
    %c0_i32 = arith.constant 0 : i32
    %c0_i32_0 = arith.constant 0 : i32
    %c0_i32_1 = arith.constant 0 : i32
    return %c0_i32, %c0_i32_0 : i32, i32
  }
  func.func @transform_9(%arg0: i32) -> (i32, i32) {
    %c0_i32 = arith.constant 0 : i32
    %c0_i32_0 = arith.constant 0 : i32
    %c0_i32_1 = arith.constant 0 : i32
    return %c0_i32, %c0_i32_0 : i32, i32
  }
  func.func @transform_10(%arg0: i32) -> (i32, i32) {
    %c0_i32 = arith.constant 0 : i32
    %c0_i32_0 = arith.constant 0 : i32
    %c0_i32_1 = arith.constant 0 : i32
    return %c0_i32, %c0_i32_0 : i32, i32
  }
  func.func @transform_11(%arg0: i32) -> (i32, i32) {
    %c0_i32 = arith.constant 0 : i32
    %c0_i32_0 = arith.constant 0 : i32
    return %c0_i32, %arg0 : i32, i32
  }
}

</mosaic_0001>

<llo_original>
// kernel: tpu_custom_call.1
$region0: #{tpu_custom_call.1}
  #allocation0 [shape = 'u32[]', space=smem, size = 0x4, offset = 0x4, fixed_abs, tag = 'smem constant byte address 0x4 - core index']
  #allocation1 [shape = 'u32[72,128]{1,0:T(1,128)}', space=vmem, size = 0x9000, scoped, tag = 'internal scratch']
  #allocation2 [shape = 'f32[1,1]{1,0:T(1,128)S(1)}', space=vmem, size = 0x200, scoped, tag = 'scoped memory for tpu_custom_call.1']
  %s0 = inlined_call_operand.vmem [shape: f32[23,128], index: 0, kind: input, shape index: {}]
  %s1 = inlined_call_operand.vmem [shape: f32[256,23], index: 1, kind: input, shape index: {}]
  %s2 = inlined_call_operand.vmem [shape: f32[256,1], index: 2, kind: input, shape index: {}]
  %s3 = inlined_call_operand.vmem [shape: f32[128,256], index: 3, kind: input, shape index: {}]
  %s4 = inlined_call_operand.vmem [shape: f32[128,1], index: 4, kind: input, shape index: {}]
  %s5 = inlined_call_operand.vmem [shape: f32[64,128], index: 5, kind: input, shape index: {}]
  %s6 = inlined_call_operand.vmem [shape: f32[64,1], index: 6, kind: input, shape index: {}]
  %s7 = inlined_call_operand.vmem [shape: f32[16,64], index: 7, kind: input, shape index: {}]
  %s8 = inlined_call_operand.vmem [shape: f32[16,1], index: 8, kind: input, shape index: {}]
  %s9 = inlined_call_operand.vmem [shape: f32[1,16], index: 9, kind: input, shape index: {}]
  %s10 = inlined_call_operand.<no memory space> [shape: f32[1,1], index: 10, kind: input, shape index: {}]
  %s11 = inlined_call_operand.hbm [shape: f32[1,128], index: 11, kind: output, shape index: {}]
  %s12 = sld [smem:[#allocation0]]
  $region54: #{tpu_custom_call.1} parent=0
    _
  %s14 = ssub.s32 1, %s12
  %s15 = scalar_select 0, %s14, %s12
  %v16 = vstv %s10
  %17 = vst [vmem:[#allocation2] sm:$0x1] %v16
  $region1: #{tpu_custom_call.1} parent=0
    #allocation3 [shape = 'u8[512]{0}', space=vmem, size = 0x400, scoped, tag = 'output window, operand 0, single buffered']
    #allocation4 [shape = 's32[1]{0}', space=sflag, size = 0x4, scoped, tag = 'scoped memory for tpu_custom_call.1']
    %18 = vsyncpa [#allocation4], 0
    // Predicated region
    $region2: #{tpu_custom_call.1} parent=1 // pred_check
      _
    $region3: #{tpu_custom_call.1} parent=1 // pred_check_branch
      %20 = sbr.rel (0) target = $region5
    $region4: #{tpu_custom_call.1} parent=1 // pred_region
      _
    $region5: #{tpu_custom_call.1} parent=1 // pred_fallthru
      _
    // Predicated region
    $region6: #{tpu_custom_call.1} parent=1 // pred_check
      _
    $region7: #{tpu_custom_call.1} parent=1 // pred_check_branch
      %22 = sbr.rel (0) target = $region9
    $region8: #{tpu_custom_call.1} parent=1 // pred_region
      _
    $region9: #{tpu_custom_call.1} parent=1 // pred_fallthru
      _
    // Predicated region
    $region10: #{tpu_custom_call.1} parent=1 // pred_check
      _
    $region11: #{tpu_custom_call.1} parent=1 // pred_check_branch
      %24 = sbr.rel (0) target = $region13
    $region12: #{tpu_custom_call.1} parent=1 // pred_region
      _
    $region13: #{tpu_custom_call.1} parent=1 // pred_fallthru
      _
    // Predicated region
    $region14: #{tpu_custom_call.1} parent=1 // pred_check
      _
    $region15: #{tpu_custom_call.1} parent=1 // pred_check_branch
      %26 = sbr.rel (0) target = $region17
    $region16: #{tpu_custom_call.1} parent=1 // pred_region
      _
    $region17: #{tpu_custom_call.1} parent=1 // pred_fallthru
      _
    // Predicated region
    $region18: #{tpu_custom_call.1} parent=1 // pred_check
      _
    $region19: #{tpu_custom_call.1} parent=1 // pred_check_branch
      %28 = sbr.rel (0) target = $region21
    $region20: #{tpu_custom_call.1} parent=1 // pred_region
      _
    $region21: #{tpu_custom_call.1} parent=1 // pred_fallthru
      _
    // Predicated region
    $region22: #{tpu_custom_call.1} parent=1 // pred_check
      _
    $region23: #{tpu_custom_call.1} parent=1 // pred_check_branch
      %30 = sbr.rel (0) target = $region25
    $region24: #{tpu_custom_call.1} parent=1 // pred_region
      _
    $region25: #{tpu_custom_call.1} parent=1 // pred_fallthru
      _
    // Predicated region
    $region26: #{tpu_custom_call.1} parent=1 // pred_check
      _
    $region27: #{tpu_custom_call.1} parent=1 // pred_check_branch
      %32 = sbr.rel (0) target = $region29
    $region28: #{tpu_custom_call.1} parent=1 // pred_region
      _
    $region29: #{tpu_custom_call.1} parent=1 // pred_fallthru
      _
    // Predicated region
    $region30: #{tpu_custom_call.1} parent=1 // pred_check
      _
    $region31: #{tpu_custom_call.1} parent=1 // pred_check_branch
      %34 = sbr.rel (0) target = $region33
    $region32: #{tpu_custom_call.1} parent=1 // pred_region
      _
    $region33: #{tpu_custom_call.1} parent=1 // pred_fallthru
      _
    // Predicated region
    $region34: #{tpu_custom_call.1} parent=1 // pred_check
      _
    $region35: #{tpu_custom_call.1} parent=1 // pred_check_branch
      %36 = sbr.rel (0) target = $region37
    $region36: #{tpu_custom_call.1} parent=1 // pred_region
      _
    $region37: #{tpu_custom_call.1} parent=1 // pred_fallthru
      _
    // Predicated region
    $region38: #{tpu_custom_call.1} parent=1 // pred_check
      _
    $region39: #{tpu_custom_call.1} parent=1 // pred_check_branch
      %38 = sbr.rel (0) target = $region41
    $region40: #{tpu_custom_call.1} parent=1 // pred_region
      _
    $region41: #{tpu_custom_call.1} parent=1 // pred_fallthru
      _
    // Predicated region
    $region42: #{tpu_custom_call.1} parent=1 // pred_check
      _
    $region43: #{tpu_custom_call.1} parent=1 // pred_check_branch
      %40 = sbr.rel (0) target = $region45
    $region44: #{tpu_custom_call.1} parent=1 // pred_region
      _
    $region45: #{tpu_custom_call.1} parent=1 // pred_fallthru
      _
    %v41 = vld [vmem:[%s1] sm:$0xff]
    %v42 = vld [vmem:[%s1 + $0x8] sm:$0xff]
    %v43 = vld [vmem:[%s1 + $0x10] sm:$0xff]
    %v44 = vld [vmem:[%s1 + $0x18] sm:$0xff]
    %v45 = vld [vmem:[%s1 + $0x20] sm:$0xff]
    %v46 = vld [vmem:[%s1 + $0x28] sm:$0xff]
    %v47 = vld [vmem:[%s1 + $0x30] sm:$0xff]
    %v48 = vld [vmem:[%s1 + $0x38] sm:$0xff]
    %v49 = vld [vmem:[%s1 + $0x40] sm:$0xff]
    %v50 = vld [vmem:[%s1 + $0x48] sm:$0xff]
    %v51 = vld [vmem:[%s1 + $0x50] sm:$0xff]
    %v52 = vld [vmem:[%s1 + $0x58] sm:$0xff]
    %v53 = vld [vmem:[%s1 + $0x60] sm:$0xff]
    %v54 = vld [vmem:[%s1 + $0x68] sm:$0xff]
    %v55 = vld [vmem:[%s1 + $0x70] sm:$0xff]
    %v56 = vld [vmem:[%s1 + $0x78] sm:$0xff]
    %v57 = vld [vmem:[%s1 + $0x80] sm:$0xff]
    %v58 = vld [vmem:[%s1 + $0x88] sm:$0xff]
    %v59 = vld [vmem:[%s1 + $0x90] sm:$0xff]
    %v60 = vld [vmem:[%s1 + $0x98] sm:$0xff]
    %v61 = vld [vmem:[%s1 + $0xa0] sm:$0xff]
    %v62 = vld [vmem:[%s1 + $0xa8] sm:$0xff]
    %v63 = vld [vmem:[%s1 + $0xb0] sm:$0xff]
    %v64 = vld [vmem:[%s1 + $0xb8] sm:$0xff]
    %v65 = vld [vmem:[%s1 + $0xc0] sm:$0xff]
    %v66 = vld [vmem:[%s1 + $0xc8] sm:$0xff]
    %v67 = vld [vmem:[%s1 + $0xd0] sm:$0xff]
    %v68 = vld [vmem:[%s1 + $0xd8] sm:$0xff]
    %v69 = vld [vmem:[%s1 + $0xe0] sm:$0xff]
    %v70 = vld [vmem:[%s1 + $0xe8] sm:$0xff]
    %v71 = vld [vmem:[%s1 + $0xf0] sm:$0xff]
    %v72 = vld [vmem:[%s1 + $0xf8] sm:$0xff]
    %v73 = vld [vmem:[%s0] sm:$0xff]
    %v74 = vld [vmem:[%s0 + $0x8] sm:$0xff]
    %v75 = vld [vmem:[%s0 + $0x10] sm:$0x7f]
    %v76 = vld [vmem:[%s2] sm:$0xff]
    %v77 = vld [vmem:[%s2 + $0x8] sm:$0xff]
    %v78 = vld [vmem:[%s2 + $0x10] sm:$0xff]
    %v79 = vld [vmem:[%s2 + $0x18] sm:$0xff]
    %v80 = vld [vmem:[%s2 + $0x20] sm:$0xff]
    %v81 = vld [vmem:[%s2 + $0x28] sm:$0xff]
    %v82 = vld [vmem:[%s2 + $0x30] sm:$0xff]
    %v83 = vld [vmem:[%s2 + $0x38] sm:$0xff]
    %v84 = vld [vmem:[%s2 + $0x40] sm:$0xff]
    %v85 = vld [vmem:[%s2 + $0x48] sm:$0xff]
    %v86 = vld [vmem:[%s2 + $0x50] sm:$0xff]
    %v87 = vld [vmem:[%s2 + $0x58] sm:$0xff]
    %v88 = vld [vmem:[%s2 + $0x60] sm:$0xff]
    %v89 = vld [vmem:[%s2 + $0x68] sm:$0xff]
    %v90 = vld [vmem:[%s2 + $0x70] sm:$0xff]
    %v91 = vld [vmem:[%s2 + $0x78] sm:$0xff]
    %v92 = vld [vmem:[%s2 + $0x80] sm:$0xff]
    %v93 = vld [vmem:[%s2 + $0x88] sm:$0xff]
    %v94 = vld [vmem:[%s2 + $0x90] sm:$0xff]
    %v95 = vld [vmem:[%s2 + $0x98] sm:$0xff]
    %v96 = vld [vmem:[%s2 + $0xa0] sm:$0xff]
    %v97 = vld [vmem:[%s2 + $0xa8] sm:$0xff]
    %v98 = vld [vmem:[%s2 + $0xb0] sm:$0xff]
    %v99 = vld [vmem:[%s2 + $0xb8] sm:$0xff]
    %v100 = vld [vmem:[%s2 + $0xc0] sm:$0xff]
    %v101 = vld [vmem:[%s2 + $0xc8] sm:$0xff]
    %v102 = vld [vmem:[%s2 + $0xd0] sm:$0xff]
    %v103 = vld [vmem:[%s2 + $0xd8] sm:$0xff]
    %v104 = vld [vmem:[%s2 + $0xe0] sm:$0xff]
    %v105 = vld [vmem:[%s2 + $0xe8] sm:$0xff]
    %v106 = vld [vmem:[%s2 + $0xf0] sm:$0xff]
    %v107 = vld [vmem:[%s2 + $0xf8] sm:$0xff]
    %109 = vset.pattern.permute.xlu0 0
    %110 = vperm.xlu0 %109, %v76
    %v111 = vpop.permute.xlu0 %110
    %114 = vset.pattern.permute.xlu0 0
    %115 = vperm.xlu0 %114, %v77
    %v116 = vpop.permute.xlu0 %115
    %119 = vset.pattern.permute.xlu0 0
    %120 = vperm.xlu0 %119, %v78
    %v121 = vpop.permute.xlu0 %120
    %124 = vset.pattern.permute.xlu0 0
    %125 = vperm.xlu0 %124, %v79
    %v126 = vpop.permute.xlu0 %125
    %129 = vset.pattern.permute.xlu0 0
    %130 = vperm.xlu0 %129, %v80
    %v131 = vpop.permute.xlu0 %130
    %134 = vset.pattern.permute.xlu0 0
    %135 = vperm.xlu0 %134, %v81
    %v136 = vpop.permute.xlu0 %135
    %139 = vset.pattern.permute.xlu0 0
    %140 = vperm.xlu0 %139, %v82
    %v141 = vpop.permute.xlu0 %140
    %144 = vset.pattern.permute.xlu0 0
    %145 = vperm.xlu0 %144, %v83
    %v146 = vpop.permute.xlu0 %145
    %149 = vset.pattern.permute.xlu0 0
    %150 = vperm.xlu0 %149, %v84
    %v151 = vpop.permute.xlu0 %150
    %154 = vset.pattern.permute.xlu0 0
    %155 = vperm.xlu0 %154, %v85
    %v156 = vpop.permute.xlu0 %155
    %159 = vset.pattern.permute.xlu0 0
    %160 = vperm.xlu0 %159, %v86
    %v161 = vpop.permute.xlu0 %160
    %164 = vset.pattern.permute.xlu0 0
    %165 = vperm.xlu0 %164, %v87
    %v166 = vpop.permute.xlu0 %165
    %169 = vset.pattern.permute.xlu0 0
    %170 = vperm.xlu0 %169, %v88
    %v171 = vpop.permute.xlu0 %170
    %174 = vset.pattern.permute.xlu0 0
    %175 = vperm.xlu0 %174, %v89
    %v176 = vpop.permute.xlu0 %175
    %179 = vset.pattern.permute.xlu0 0
    %180 = vperm.xlu0 %179, %v90
    %v181 = vpop.permute.xlu0 %180
    %184 = vset.pattern.permute.xlu0 0
    %185 = vperm.xlu0 %184, %v91
    %v186 = vpop.permute.xlu0 %185
    %189 = vset.pattern.permute.xlu0 0
    %190 = vperm.xlu0 %189, %v92
    %v191 = vpop.permute.xlu0 %190
    %194 = vset.pattern.permute.xlu0 0
    %195 = vperm.xlu0 %194, %v93
    %v196 = vpop.permute.xlu0 %195
    %199 = vset.pattern.permute.xlu0 0
    %200 = vperm.xlu0 %199, %v94
    %v201 = vpop.permute.xlu0 %200
    %204 = vset.pattern.permute.xlu0 0
    %205 = vperm.xlu0 %204, %v95
    %v206 = vpop.permute.xlu0 %205
    %209 = vset.pattern.permute.xlu0 0
    %210 = vperm.xlu0 %209, %v96
    %v211 = vpop.permute.xlu0 %210
    %214 = vset.pattern.permute.xlu0 0
    %215 = vperm.xlu0 %214, %v97
    %v216 = vpop.permute.xlu0 %215
    %219 = vset.pattern.permute.xlu0 0
    %220 = vperm.xlu0 %219, %v98
    %v221 = vpop.permute.xlu0 %220
    %224 = vset.pattern.permute.xlu0 0
    %225 = vperm.xlu0 %224, %v99
    %v226 = vpop.permute.xlu0 %225
    %229 = vset.pattern.permute.xlu0 0
    %230 = vperm.xlu0 %229, %v100
    %v231 = vpop.permute.xlu0 %230
    %234 = vset.pattern.permute.xlu0 0
    %235 = vperm.xlu0 %234, %v101
    %v236 = vpop.permute.xlu0 %235
    %239 = vset.pattern.permute.xlu0 0
    %240 = vperm.xlu0 %239, %v102
    %v241 = vpop.permute.xlu0 %240
    %244 = vset.pattern.permute.xlu0 0
    %245 = vperm.xlu0 %244, %v103
    %v246 = vpop.permute.xlu0 %245
    %249 = vset.pattern.permute.xlu0 0
    %250 = vperm.xlu0 %249, %v104
    %v251 = vpop.permute.xlu0 %250
    %254 = vset.pattern.permute.xlu0 0
    %255 = vperm.xlu0 %254, %v105
    %v256 = vpop.permute.xlu0 %255
    %259 = vset.pattern.permute.xlu0 0
    %260 = vperm.xlu0 %259, %v106
    %v261 = vpop.permute.xlu0 %260
    %264 = vset.pattern.permute.xlu0 0
    %265 = vperm.xlu0 %264, %v107
    %v266 = vpop.permute.xlu0 %265
    %vm268 = vcmask 187392
    %v270 = vsel %vm268, %v41, 0
    %v273 = vsel %vm268, %v42, 0
    %v276 = vsel %vm268, %v43, 0
    %v279 = vsel %vm268, %v44, 0
    %v282 = vsel %vm268, %v45, 0
    %v285 = vsel %vm268, %v46, 0
    %v288 = vsel %vm268, %v47, 0
    %v291 = vsel %vm268, %v48, 0
    %v294 = vsel %vm268, %v49, 0
    %v297 = vsel %vm268, %v50, 0
    %v300 = vsel %vm268, %v51, 0
    %v303 = vsel %vm268, %v52, 0
    %v306 = vsel %vm268, %v53, 0
    %v309 = vsel %vm268, %v54, 0
    %v312 = vsel %vm268, %v55, 0
    %v315 = vsel %vm268, %v56, 0
    %v318 = vsel %vm268, %v57, 0
    %v321 = vsel %vm268, %v58, 0
    %v324 = vsel %vm268, %v59, 0
    %v327 = vsel %vm268, %v60, 0
    %v330 = vsel %vm268, %v61, 0
    %v333 = vsel %vm268, %v62, 0
    %v336 = vsel %vm268, %v63, 0
    %v339 = vsel %vm268, %v64, 0
    %v342 = vsel %vm268, %v65, 0
    %v345 = vsel %vm268, %v66, 0
    %v348 = vsel %vm268, %v67, 0
    %v351 = vsel %vm268, %v68, 0
    %v354 = vsel %vm268, %v69, 0
    %v357 = vsel %vm268, %v70, 0
    %v360 = vsel %vm268, %v71, 0
    %v363 = vsel %vm268, %v72, 0
    %vm365 = vcmask 1046528
    %v367 = vsel %vm365, %v75, 0
    %369 = vmatpush.msra.mxu0 0.0
    %370 = vmatpush.msra.mxu0 0.0
    %371 = vmatpush.msra.mxu0 0.0
    %372 = vmatpush.msra.mxu0 0.0
    %373 = vmatpush.msra.mxu0 0.0
    %374 = vmatpush.msra.mxu0 0.0
    %375 = vmatpush.msra.mxu0 0.0
    %376 = vmatpush.msra.mxu0 0.0
    %377 = vmatpush.msra.mxu0 0.0
    %378 = vmatpush.msra.mxu0 0.0
    %379 = vmatpush.msra.mxu0 0.0
    %380 = vmatpush.msra.mxu0 0.0
    %381 = vmatpush.msra.mxu0 0.0
    %382 = vmatpush.msra.mxu0 %v367
    %383 = vmatpush.msra.mxu0 %v74
    %384 = vmatpush.msra.mxu0 %v73
    %385 = vmatmul.f32.gmra.mxu0 %v270
    %v386 = vpop.f32.mrf.mxu0
    %v387 = vadd.f32 %v111, %v386
    %388 = vmatmul.f32.gmra.mxu0 %v273
    %v389 = vpop.f32.mrf.mxu0
    %v390 = vadd.f32 %v116, %v389
    %391 = vmatmul.f32.gmra.mxu0 %v276
    %v392 = vpop.f32.mrf.mxu0
    %v393 = vadd.f32 %v121, %v392
    %394 = vmatmul.f32.gmra.mxu0 %v279
    %v395 = vpop.f32.mrf.mxu0
    %v396 = vadd.f32 %v126, %v395
    %397 = vmatmul.f32.gmra.mxu0 %v282
    %v398 = vpop.f32.mrf.mxu0
    %v399 = vadd.f32 %v131, %v398
    %400 = vmatmul.f32.gmra.mxu0 %v285
    %v401 = vpop.f32.mrf.mxu0
    %v402 = vadd.f32 %v136, %v401
    %403 = vmatmul.f32.gmra.mxu0 %v288
    %v404 = vpop.f32.mrf.mxu0
    %v405 = vadd.f32 %v141, %v404
    %406 = vmatmul.f32.gmra.mxu0 %v291
    %v407 = vpop.f32.mrf.mxu0
    %v408 = vadd.f32 %v146, %v407
    %409 = vmatmul.f32.gmra.mxu0 %v294
    %v410 = vpop.f32.mrf.mxu0
    %v411 = vadd.f32 %v151, %v410
    %412 = vmatmul.f32.gmra.mxu0 %v297
    %v413 = vpop.f32.mrf.mxu0
    %v414 = vadd.f32 %v156, %v413
    %415 = vmatmul.f32.gmra.mxu0 %v300
    %v416 = vpop.f32.mrf.mxu0
    %v417 = vadd.f32 %v161, %v416
    %418 = vmatmul.f32.gmra.mxu0 %v303
    %v419 = vpop.f32.mrf.mxu0
    %v420 = vadd.f32 %v166, %v419
    %421 = vmatmul.f32.gmra.mxu0 %v306
    %v422 = vpop.f32.mrf.mxu0
    %v423 = vadd.f32 %v171, %v422
    %424 = vmatmul.f32.gmra.mxu0 %v309
    %v425 = vpop.f32.mrf.mxu0
    %v426 = vadd.f32 %v176, %v425
    %427 = vmatmul.f32.gmra.mxu0 %v312
    %v428 = vpop.f32.mrf.mxu0
    %v429 = vadd.f32 %v181, %v428
    %430 = vmatmul.f32.gmra.mxu0 %v315
    %v431 = vpop.f32.mrf.mxu0
    %v432 = vadd.f32 %v186, %v431
    %433 = vmatmul.f32.gmra.mxu0 %v318
    %v434 = vpop.f32.mrf.mxu0
    %v435 = vadd.f32 %v191, %v434
    %436 = vmatmul.f32.gmra.mxu0 %v321
    %v437 = vpop.f32.mrf.mxu0
    %v438 = vadd.f32 %v196, %v437
    %439 = vmatmul.f32.gmra.mxu0 %v324
    %v440 = vpop.f32.mrf.mxu0
    %v441 = vadd.f32 %v201, %v440
    %442 = vmatmul.f32.gmra.mxu0 %v327
    %v443 = vpop.f32.mrf.mxu0
    %v444 = vadd.f32 %v206, %v443
    %445 = vmatmul.f32.gmra.mxu0 %v330
    %v446 = vpop.f32.mrf.mxu0
    %v447 = vadd.f32 %v211, %v446
    %448 = vmatmul.f32.gmra.mxu0 %v333
    %v449 = vpop.f32.mrf.mxu0
    %v450 = vadd.f32 %v216, %v449
    %451 = vmatmul.f32.gmra.mxu0 %v336
    %v452 = vpop.f32.mrf.mxu0
    %v453 = vadd.f32 %v221, %v452
    %454 = vmatmul.f32.gmra.mxu0 %v339
    %v455 = vpop.f32.mrf.mxu0
    %v456 = vadd.f32 %v226, %v455
    %457 = vmatmul.f32.gmra.mxu0 %v342
    %v458 = vpop.f32.mrf.mxu0
    %v459 = vadd.f32 %v231, %v458
    %460 = vmatmul.f32.gmra.mxu0 %v345
    %v461 = vpop.f32.mrf.mxu0
    %v462 = vadd.f32 %v236, %v461
    %463 = vmatmul.f32.gmra.mxu0 %v348
    %v464 = vpop.f32.mrf.mxu0
    %v465 = vadd.f32 %v241, %v464
    %466 = vmatmul.f32.gmra.mxu0 %v351
    %v467 = vpop.f32.mrf.mxu0
    %v468 = vadd.f32 %v246, %v467
    %469 = vmatmul.f32.gmra.mxu0 %v354
    %v470 = vpop.f32.mrf.mxu0
    %v471 = vadd.f32 %v251, %v470
    %472 = vmatmul.f32.gmra.mxu0 %v357
    %v473 = vpop.f32.mrf.mxu0
    %v474 = vadd.f32 %v256, %v473
    %475 = vmatmul.f32.gmra.mxu0 %v360
    %v476 = vpop.f32.mrf.mxu0
    %v477 = vadd.f32 %v261, %v476
    %478 = vmatmul.f32.gmra.mxu0 %v363
    %v479 = vpop.f32.mrf.mxu0
    %v480 = vadd.f32 %v266, %v479
    %481 = vdwg.mxu0
    %v482 = vmax.f32 %v387, 0.0
    %v483 = vmax.f32 %v390, 0.0
    %v484 = vmax.f32 %v393, 0.0
    %v485 = vmax.f32 %v396, 0.0
    %v486 = vmax.f32 %v399, 0.0
    %v487 = vmax.f32 %v402, 0.0
    %v488 = vmax.f32 %v405, 0.0
    %v489 = vmax.f32 %v408, 0.0
    %v490 = vmax.f32 %v411, 0.0
    %v491 = vmax.f32 %v414, 0.0
    %v492 = vmax.f32 %v417, 0.0
    %v493 = vmax.f32 %v420, 0.0
    %v494 = vmax.f32 %v423, 0.0
    %v495 = vmax.f32 %v426, 0.0
    %v496 = vmax.f32 %v429, 0.0
    %v497 = vmax.f32 %v432, 0.0
    %v498 = vmax.f32 %v435, 0.0
    %v499 = vmax.f32 %v438, 0.0
    %v500 = vmax.f32 %v441, 0.0
    %v501 = vmax.f32 %v444, 0.0
    %v502 = vmax.f32 %v447, 0.0
    %v503 = vmax.f32 %v450, 0.0
    %v504 = vmax.f32 %v453, 0.0
    %v505 = vmax.f32 %v456, 0.0
    %v506 = vmax.f32 %v459, 0.0
    %v507 = vmax.f32 %v462, 0.0
    %v508 = vmax.f32 %v465, 0.0
    %v509 = vmax.f32 %v468, 0.0
    %v510 = vmax.f32 %v471, 0.0
    %v511 = vmax.f32 %v474, 0.0
    %v512 = vmax.f32 %v477, 0.0
    %v513 = vmax.f32 %v480, 0.0
    %v514 = vld [vmem:[%s3] sm:$0xff]
    %v515 = vld [vmem:[%s3 + $0x8] sm:$0xff]
    %v516 = vld [vmem:[%s3 + $0x10] sm:$0xff]
    %v517 = vld [vmem:[%s3 + $0x18] sm:$0xff]
    %v518 = vld [vmem:[%s3 + $0x20] sm:$0xff]
    %v519 = vld [vmem:[%s3 + $0x28] sm:$0xff]
    %v520 = vld [vmem:[%s3 + $0x30] sm:$0xff]
    %v521 = vld [vmem:[%s3 + $0x38] sm:$0xff]
    %v522 = vld [vmem:[%s3 + $0x40] sm:$0xff]
    %v523 = vld [vmem:[%s3 + $0x48] sm:$0xff]
    %v524 = vld [vmem:[%s3 + $0x50] sm:$0xff]
    %v525 = vld [vmem:[%s3 + $0x58] sm:$0xff]
    %v526 = vld [vmem:[%s3 + $0x60] sm:$0xff]
    %v527 = vld [vmem:[%s3 + $0x68] sm:$0xff]
    %v528 = vld [vmem:[%s3 + $0x70] sm:$0xff]
    %v529 = vld [vmem:[%s3 + $0x78] sm:$0xff]
    %v530 = vld [vmem:[%s3 + $0x80] sm:$0xff]
    %v531 = vld [vmem:[%s3 + $0x88] sm:$0xff]
    %v532 = vld [vmem:[%s3 + $0x90] sm:$0xff]
    %v533 = vld [vmem:[%s3 + $0x98] sm:$0xff]
    %v534 = vld [vmem:[%s3 + $0xa0] sm:$0xff]
    %v535 = vld [vmem:[%s3 + $0xa8] sm:$0xff]
    %v536 = vld [vmem:[%s3 + $0xb0] sm:$0xff]
    %v537 = vld [vmem:[%s3 + $0xb8] sm:$0xff]
    %v538 = vld [vmem:[%s3 + $0xc0] sm:$0xff]
    %v539 = vld [vmem:[%s3 + $0xc8] sm:$0xff]
    %v540 = vld [vmem:[%s3 + $0xd0] sm:$0xff]
    %v541 = vld [vmem:[%s3 + $0xd8] sm:$0xff]
    %v542 = vld [vmem:[%s3 + $0xe0] sm:$0xff]
    %v543 = vld [vmem:[%s3 + $0xe8] sm:$0xff]
    %v544 = vld [vmem:[%s3 + $0xf0] sm:$0xff]
    %v545 = vld [vmem:[%s3 + $0xf8] sm:$0xff]
    %v546 = vld [vmem:[%s4] sm:$0xff]
    %v547 = vld [vmem:[%s4 + $0x8] sm:$0xff]
    %v548 = vld [vmem:[%s4 + $0x10] sm:$0xff]
    %v549 = vld [vmem:[%s4 + $0x18] sm:$0xff]
    %v550 = vld [vmem:[%s4 + $0x20] sm:$0xff]
    %v551 = vld [vmem:[%s4 + $0x28] sm:$0xff]
    %v552 = vld [vmem:[%s4 + $0x30] sm:$0xff]
    %v553 = vld [vmem:[%s4 + $0x38] sm:$0xff]
    %v554 = vld [vmem:[%s4 + $0x40] sm:$0xff]
    %v555 = vld [vmem:[%s4 + $0x48] sm:$0xff]
    %v556 = vld [vmem:[%s4 + $0x50] sm:$0xff]
    %v557 = vld [vmem:[%s4 + $0x58] sm:$0xff]
    %v558 = vld [vmem:[%s4 + $0x60] sm:$0xff]
    %v559 = vld [vmem:[%s4 + $0x68] sm:$0xff]
    %v560 = vld [vmem:[%s4 + $0x70] sm:$0xff]
    %v561 = vld [vmem:[%s4 + $0x78] sm:$0xff]
    %563 = vset.pattern.permute.xlu0 0
    %564 = vperm.xlu0 %563, %v546
    %v565 = vpop.permute.xlu0 %564
    %568 = vset.pattern.permute.xlu0 0
    %569 = vperm.xlu0 %568, %v547
    %v570 = vpop.permute.xlu0 %569
    %573 = vset.pattern.permute.xlu0 0
    %574 = vperm.xlu0 %573, %v548
    %v575 = vpop.permute.xlu0 %574
    %578 = vset.pattern.permute.xlu0 0
    %579 = vperm.xlu0 %578, %v549
    %v580 = vpop.permute.xlu0 %579
    %583 = vset.pattern.permute.xlu0 0
    %584 = vperm.xlu0 %583, %v550
    %v585 = vpop.permute.xlu0 %584
    %588 = vset.pattern.permute.xlu0 0
    %589 = vperm.xlu0 %588, %v551
    %v590 = vpop.permute.xlu0 %589
    %593 = vset.pattern.permute.xlu0 0
    %594 = vperm.xlu0 %593, %v552
    %v595 = vpop.permute.xlu0 %594
    %598 = vset.pattern.permute.xlu0 0
    %599 = vperm.xlu0 %598, %v553
    %v600 = vpop.permute.xlu0 %599
    %603 = vset.pattern.permute.xlu0 0
    %604 = vperm.xlu0 %603, %v554
    %v605 = vpop.permute.xlu0 %604
    %608 = vset.pattern.permute.xlu0 0
    %609 = vperm.xlu0 %608, %v555
    %v610 = vpop.permute.xlu0 %609
    %613 = vset.pattern.permute.xlu0 0
    %614 = vperm.xlu0 %613, %v556
    %v615 = vpop.permute.xlu0 %614
    %618 = vset.pattern.permute.xlu0 0
    %619 = vperm.xlu0 %618, %v557
    %v620 = vpop.permute.xlu0 %619
    %623 = vset.pattern.permute.xlu0 0
    %624 = vperm.xlu0 %623, %v558
    %v625 = vpop.permute.xlu0 %624
    %628 = vset.pattern.permute.xlu0 0
    %629 = vperm.xlu0 %628, %v559
    %v630 = vpop.permute.xlu0 %629
    %633 = vset.pattern.permute.xlu0 0
    %634 = vperm.xlu0 %633, %v560
    %v635 = vpop.permute.xlu0 %634
    %638 = vset.pattern.permute.xlu0 0
    %639 = vperm.xlu0 %638, %v561
    %v640 = vpop.permute.xlu0 %639
    %642 = vmatpush.msra.mxu0 %v497
    %643 = vmatpush.msra.mxu0 %v496
    %644 = vmatpush.msra.mxu0 %v495
    %645 = vmatpush.msra.mxu0 %v494
    %646 = vmatpush.msra.mxu0 %v493
    %647 = vmatpush.msra.mxu0 %v492
    %648 = vmatpush.msra.mxu0 %v491
    %649 = vmatpush.msra.mxu0 %v490
    %650 = vmatpush.msra.mxu0 %v489
    %651 = vmatpush.msra.mxu0 %v488
    %652 = vmatpush.msra.mxu0 %v487
    %653 = vmatpush.msra.mxu0 %v486
    %654 = vmatpush.msra.mxu0 %v485
    %655 = vmatpush.msra.mxu0 %v484
    %656 = vmatpush.msra.mxu0 %v483
    %657 = vmatpush.msra.mxu0 %v482
    %658 = vmatmul.f32.gmra.mxu0 %v514
    %v659 = vpop.f32.mrf.mxu0
    %v660 = vadd.f32 %v565, %v659
    %661 = vmatmul.f32.gmra.mxu0 %v516
    %v662 = vpop.f32.mrf.mxu0
    %v663 = vadd.f32 %v570, %v662
    %664 = vmatmul.f32.gmra.mxu0 %v518
    %v665 = vpop.f32.mrf.mxu0
    %v666 = vadd.f32 %v575, %v665
    %667 = vmatmul.f32.gmra.mxu0 %v520
    %v668 = vpop.f32.mrf.mxu0
    %v669 = vadd.f32 %v580, %v668
    %670 = vmatmul.f32.gmra.mxu0 %v522
    %v671 = vpop.f32.mrf.mxu0
    %v672 = vadd.f32 %v585, %v671
    %673 = vmatmul.f32.gmra.mxu0 %v524
    %v674 = vpop.f32.mrf.mxu0
    %v675 = vadd.f32 %v590, %v674
    %676 = vmatmul.f32.gmra.mxu0 %v526
    %v677 = vpop.f32.mrf.mxu0
    %v678 = vadd.f32 %v595, %v677
    %679 = vmatmul.f32.gmra.mxu0 %v528
    %v680 = vpop.f32.mrf.mxu0
    %v681 = vadd.f32 %v600, %v680
    %682 = vmatmul.f32.gmra.mxu0 %v530
    %v683 = vpop.f32.mrf.mxu0
    %v684 = vadd.f32 %v605, %v683
    %685 = vmatmul.f32.gmra.mxu0 %v532
    %v686 = vpop.f32.mrf.mxu0
    %v687 = vadd.f32 %v610, %v686
    %688 = vmatmul.f32.gmra.mxu0 %v534
    %v689 = vpop.f32.mrf.mxu0
    %v690 = vadd.f32 %v615, %v689
    %691 = vmatmul.f32.gmra.mxu0 %v536
    %v692 = vpop.f32.mrf.mxu0
    %v693 = vadd.f32 %v620, %v692
    %694 = vmatmul.f32.gmra.mxu0 %v538
    %v695 = vpop.f32.mrf.mxu0
    %v696 = vadd.f32 %v625, %v695
    %697 = vmatmul.f32.gmra.mxu0 %v540
    %v698 = vpop.f32.mrf.mxu0
    %v699 = vadd.f32 %v630, %v698
    %700 = vmatmul.f32.gmra.mxu0 %v542
    %v701 = vpop.f32.mrf.mxu0
    %v702 = vadd.f32 %v635, %v701
    %703 = vmatmul.f32.gmra.mxu0 %v544
    %v704 = vpop.f32.mrf.mxu0
    %v705 = vadd.f32 %v640, %v704
    %706 = vdwg.mxu0
    %707 = vmatpush.msra.mxu0 %v513
    %708 = vmatpush.msra.mxu0 %v512
    %709 = vmatpush.msra.mxu0 %v511
    %710 = vmatpush.msra.mxu0 %v510
    %711 = vmatpush.msra.mxu0 %v509
    %712 = vmatpush.msra.mxu0 %v508
    %713 = vmatpush.msra.mxu0 %v507
    %714 = vmatpush.msra.mxu0 %v506
    %715 = vmatpush.msra.mxu0 %v505
    %716 = vmatpush.msra.mxu0 %v504
    %717 = vmatpush.msra.mxu0 %v503
    %718 = vmatpush.msra.mxu0 %v502
    %719 = vmatpush.msra.mxu0 %v501
    %720 = vmatpush.msra.mxu0 %v500
    %721 = vmatpush.msra.mxu0 %v499
    %722 = vmatpush.msra.mxu0 %v498
    %723 = vmatmul.f32.gmra.mxu0 %v515
    %v724 = vpop.f32.mrf.mxu0
    %v725 = vadd.f32 %v660, %v724
    %726 = vmatmul.f32.gmra.mxu0 %v517
    %v727 = vpop.f32.mrf.mxu0
    %v728 = vadd.f32 %v663, %v727
    %729 = vmatmul.f32.gmra.mxu0 %v519
    %v730 = vpop.f32.mrf.mxu0
    %v731 = vadd.f32 %v666, %v730
    %732 = vmatmul.f32.gmra.mxu0 %v521
    %v733 = vpop.f32.mrf.mxu0
    %v734 = vadd.f32 %v669, %v733
    %735 = vmatmul.f32.gmra.mxu0 %v523
    %v736 = vpop.f32.mrf.mxu0
    %v737 = vadd.f32 %v672, %v736
    %738 = vmatmul.f32.gmra.mxu0 %v525
    %v739 = vpop.f32.mrf.mxu0
    %v740 = vadd.f32 %v675, %v739
    %741 = vmatmul.f32.gmra.mxu0 %v527
    %v742 = vpop.f32.mrf.mxu0
    %v743 = vadd.f32 %v678, %v742
    %744 = vmatmul.f32.gmra.mxu0 %v529
    %v745 = vpop.f32.mrf.mxu0
    %v746 = vadd.f32 %v681, %v745
    %747 = vmatmul.f32.gmra.mxu0 %v531
    %v748 = vpop.f32.mrf.mxu0
    %v749 = vadd.f32 %v684, %v748
    %750 = vmatmul.f32.gmra.mxu0 %v533
    %v751 = vpop.f32.mrf.mxu0
    %v752 = vadd.f32 %v687, %v751
    %753 = vmatmul.f32.gmra.mxu0 %v535
    %v754 = vpop.f32.mrf.mxu0
    %v755 = vadd.f32 %v690, %v754
    %756 = vmatmul.f32.gmra.mxu0 %v537
    %v757 = vpop.f32.mrf.mxu0
    %v758 = vadd.f32 %v693, %v757
    %759 = vmatmul.f32.gmra.mxu0 %v539
    %v760 = vpop.f32.mrf.mxu0
    %v761 = vadd.f32 %v696, %v760
    %762 = vmatmul.f32.gmra.mxu0 %v541
    %v763 = vpop.f32.mrf.mxu0
    %v764 = vadd.f32 %v699, %v763
    %765 = vmatmul.f32.gmra.mxu0 %v543
    %v766 = vpop.f32.mrf.mxu0
    %v767 = vadd.f32 %v702, %v766
    %768 = vmatmul.f32.gmra.mxu0 %v545
    %v769 = vpop.f32.mrf.mxu0
    %v770 = vadd.f32 %v705, %v769
    %771 = vdwg.mxu0
    %v772 = vmax.f32 %v725, 0.0
    %v773 = vmax.f32 %v728, 0.0
    %v774 = vmax.f32 %v731, 0.0
    %v775 = vmax.f32 %v734, 0.0
    %v776 = vmax.f32 %v737, 0.0
    %v777 = vmax.f32 %v740, 0.0
    %v778 = vmax.f32 %v743, 0.0
    %v779 = vmax.f32 %v746, 0.0
    %v780 = vmax.f32 %v749, 0.0
    %v781 = vmax.f32 %v752, 0.0
    %v782 = vmax.f32 %v755, 0.0
    %v783 = vmax.f32 %v758, 0.0
    %v784 = vmax.f32 %v761, 0.0
    %v785 = vmax.f32 %v764, 0.0
    %v786 = vmax.f32 %v767, 0.0
    %v787 = vmax.f32 %v770, 0.0
    %v788 = vld [vmem:[%s5] sm:$0xff]
    %v789 = vld [vmem:[%s5 + $0x8] sm:$0xff]
    %v790 = vld [vmem:[%s5 + $0x10] sm:$0xff]
    %v791 = vld [vmem:[%s5 + $0x18] sm:$0xff]
    %v792 = vld [vmem:[%s5 + $0x20] sm:$0xff]
    %v793 = vld [vmem:[%s5 + $0x28] sm:$0xff]
    %v794 = vld [vmem:[%s5 + $0x30] sm:$0xff]
    %v795 = vld [vmem:[%s5 + $0x38] sm:$0xff]
    %v796 = vld [vmem:[%s6] sm:$0xff]
    %v797 = vld [vmem:[%s6 + $0x8] sm:$0xff]
    %v798 = vld [vmem:[%s6 + $0x10] sm:$0xff]
    %v799 = vld [vmem:[%s6 + $0x18] sm:$0xff]
    %v800 = vld [vmem:[%s6 + $0x20] sm:$0xff]
    %v801 = vld [vmem:[%s6 + $0x28] sm:$0xff]
    %v802 = vld [vmem:[%s6 + $0x30] sm:$0xff]
    %v803 = vld [vmem:[%s6 + $0x38] sm:$0xff]
    %805 = vset.pattern.permute.xlu0 0
    %806 = vperm.xlu0 %805, %v796
    %v807 = vpop.permute.xlu0 %806
    %810 = vset.pattern.permute.xlu0 0
    %811 = vperm.xlu0 %810, %v797
    %v812 = vpop.permute.xlu0 %811
    %815 = vset.pattern.permute.xlu0 0
    %816 = vperm.xlu0 %815, %v798
    %v817 = vpop.permute.xlu0 %816
    %820 = vset.pattern.permute.xlu0 0
    %821 = vperm.xlu0 %820, %v799
    %v822 = vpop.permute.xlu0 %821
    %825 = vset.pattern.permute.xlu0 0
    %826 = vperm.xlu0 %825, %v800
    %v827 = vpop.permute.xlu0 %826
    %830 = vset.pattern.permute.xlu0 0
    %831 = vperm.xlu0 %830, %v801
    %v832 = vpop.permute.xlu0 %831
    %835 = vset.pattern.permute.xlu0 0
    %836 = vperm.xlu0 %835, %v802
    %v837 = vpop.permute.xlu0 %836
    %840 = vset.pattern.permute.xlu0 0
    %841 = vperm.xlu0 %840, %v803
    %v842 = vpop.permute.xlu0 %841
    %844 = vmatpush.msra.mxu0 %v787
    %845 = vmatpush.msra.mxu0 %v786
    %846 = vmatpush.msra.mxu0 %v785
    %847 = vmatpush.msra.mxu0 %v784
    %848 = vmatpush.msra.mxu0 %v783
    %849 = vmatpush.msra.mxu0 %v782
    %850 = vmatpush.msra.mxu0 %v781
    %851 = vmatpush.msra.mxu0 %v780
    %852 = vmatpush.msra.mxu0 %v779
    %853 = vmatpush.msra.mxu0 %v778
    %854 = vmatpush.msra.mxu0 %v777
    %855 = vmatpush.msra.mxu0 %v776
    %856 = vmatpush.msra.mxu0 %v775
    %857 = vmatpush.msra.mxu0 %v774
    %858 = vmatpush.msra.mxu0 %v773
    %859 = vmatpush.msra.mxu0 %v772
    %860 = vmatmul.f32.gmra.mxu0 %v788
    %v861 = vpop.f32.mrf.mxu0
    %v862 = vadd.f32 %v807, %v861
    %863 = vmatmul.f32.gmra.mxu0 %v789
    %v864 = vpop.f32.mrf.mxu0
    %v865 = vadd.f32 %v812, %v864
    %866 = vmatmul.f32.gmra.mxu0 %v790
    %v867 = vpop.f32.mrf.mxu0
    %v868 = vadd.f32 %v817, %v867
    %869 = vmatmul.f32.gmra.mxu0 %v791
    %v870 = vpop.f32.mrf.mxu0
    %v871 = vadd.f32 %v822, %v870
    %872 = vmatmul.f32.gmra.mxu0 %v792
    %v873 = vpop.f32.mrf.mxu0
    %v874 = vadd.f32 %v827, %v873
    %875 = vmatmul.f32.gmra.mxu0 %v793
    %v876 = vpop.f32.mrf.mxu0
    %v877 = vadd.f32 %v832, %v876
    %878 = vmatmul.f32.gmra.mxu0 %v794
    %v879 = vpop.f32.mrf.mxu0
    %v880 = vadd.f32 %v837, %v879
    %881 = vmatmul.f32.gmra.mxu0 %v795
    %v882 = vpop.f32.mrf.mxu0
    %v883 = vadd.f32 %v842, %v882
    %884 = vdwg.mxu0
    %v885 = vmax.f32 %v862, 0.0
    %v886 = vmax.f32 %v865, 0.0
    %v887 = vmax.f32 %v868, 0.0
    %v888 = vmax.f32 %v871, 0.0
    %v889 = vmax.f32 %v874, 0.0
    %v890 = vmax.f32 %v877, 0.0
    %v891 = vmax.f32 %v880, 0.0
    %v892 = vmax.f32 %v883, 0.0
    %v893 = vld [vmem:[%s7] sm:$0xff]
    %v894 = vld [vmem:[%s7 + $0x8] sm:$0xff]
    %v895 = vld [vmem:[%s8] sm:$0xff]
    %v896 = vld [vmem:[%s8 + $0x8] sm:$0xff]
    %898 = vset.pattern.permute.xlu0 0
    %899 = vperm.xlu0 %898, %v895
    %v900 = vpop.permute.xlu0 %899
    %903 = vset.pattern.permute.xlu0 0
    %904 = vperm.xlu0 %903, %v896
    %v905 = vpop.permute.xlu0 %904
    %vm907 = vcmask 523264
    %v909 = vsel %vm907, %v893, 0
    %v912 = vsel %vm907, %v894, 0
    %914 = vmatpush.msra.mxu0 0.0
    %915 = vmatpush.msra.mxu0 0.0
    %916 = vmatpush.msra.mxu0 0.0
    %917 = vmatpush.msra.mxu0 0.0
    %918 = vmatpush.msra.mxu0 0.0
    %919 = vmatpush.msra.mxu0 0.0
    %920 = vmatpush.msra.mxu0 0.0
    %921 = vmatpush.msra.mxu0 0.0
    %922 = vmatpush.msra.mxu0 %v892
    %923 = vmatpush.msra.mxu0 %v891
    %924 = vmatpush.msra.mxu0 %v890
    %925 = vmatpush.msra.mxu0 %v889
    %926 = vmatpush.msra.mxu0 %v888
    %927 = vmatpush.msra.mxu0 %v887
    %928 = vmatpush.msra.mxu0 %v886
    %929 = vmatpush.msra.mxu0 %v885
    %930 = vmatmul.f32.gmra.mxu0 %v909
    %v931 = vpop.f32.mrf.mxu0
    %v932 = vadd.f32 %v900, %v931
    %933 = vmatmul.f32.gmra.mxu0 %v912
    %v934 = vpop.f32.mrf.mxu0
    %v935 = vadd.f32 %v905, %v934
    %936 = vdwg.mxu0
    %v937 = vmax.f32 %v932, 0.0
    %v938 = vmax.f32 %v935, 0.0
    %v939 = vld [vmem:[%s9] sm:$0x1]
    %v940 = vld [vmem:[#allocation2] sm:$0x1]
    %942 = vset.pattern.permute.xlu0 0
    %943 = vperm.xlu0 %942, %v940
    %v944 = vpop.permute.xlu0 %943
    %v946 = vperm.slane %v944, 0
    %vm947 = vcmask 130048
    %v949 = vsel %vm947, %v939, 0
    %951 = vmatpush.msra.mxu0 0.0
    %952 = vmatpush.msra.mxu0 0.0
    %953 = vmatpush.msra.mxu0 0.0
    %954 = vmatpush.msra.mxu0 0.0
    %955 = vmatpush.msra.mxu0 0.0
    %956 = vmatpush.msra.mxu0 0.0
    %957 = vmatpush.msra.mxu0 0.0
    %958 = vmatpush.msra.mxu0 0.0
    %959 = vmatpush.msra.mxu0 0.0
    %960 = vmatpush.msra.mxu0 0.0
    %961 = vmatpush.msra.mxu0 0.0
    %962 = vmatpush.msra.mxu0 0.0
    %963 = vmatpush.msra.mxu0 0.0
    %964 = vmatpush.msra.mxu0 0.0
    %965 = vmatpush.msra.mxu0 %v938
    %966 = vmatpush.msra.mxu0 %v937
    %967 = vmatmul.f32.gmra.mxu0 %v949
    %v968 = vpop.f32.mrf.mxu0
    %v969 = vadd.f32 %v946, %v968
    %970 = vdwg.mxu0
    %971 = vst [vmem:[#allocation3] sm:$0x1] %v969
    // Predicated region
    $region46: #{tpu_custom_call.1} parent=1 // pred_check
      _
    $region47: #{tpu_custom_call.1} parent=1 // pred_check_branch
      %973 = sbr.rel (0) target = $region49
    $region48: #{tpu_custom_call.1} parent=1 // pred_region
      %975 = vsyncadd [#allocation4], 0
      %s977 = sshll.u32 [#allocation3], 4
      %s978 = int_to_ptr.vmem [resolvable:$true] %s977
      %s979 = sshll.u32 %s11, 4
      %s980 = int_to_ptr.hbm [resolvable:$true] %s979
      %982 = dma.vmem_to_hbm [thread:$0]  %s978, 16, %s980, [#allocation4]
    $region49: #{tpu_custom_call.1} parent=1 // pred_fallthru
      _
    // Predicated region
    $region50: #{tpu_custom_call.1} parent=1 // pred_check
      _
    $region51: #{tpu_custom_call.1} parent=1 // pred_check_branch
      %984 = sbr.rel (0) target = $region53
    $region52: #{tpu_custom_call.1} parent=1 // pred_region
      %986 = dma.done [#allocation4], 16
    $region53: #{tpu_custom_call.1} parent=1 // pred_fallthru
      _
    %987 = vsyncpa [#allocation4], 1

</llo_original>
